<compile_context>
chip_gen: v5e
topology: v5e:2x2
jax: 0.10.0
libtpu: 0.0.40
codegen_flags: <defaults>
</compile_context>

<pallas_src>
import math
import functools

import jax
import jax.numpy as jnp
from jax.experimental import pallas as pl
from jax.experimental.pallas import tpu as pltpu


def _round_up(n, m):
    return ((n + m - 1) // m) * m


def _mlp_kernel(x_ref, w1_ref, w2_ref, o_ref, acc_ref, *, approximate_gelu):
    # x_ref  : [tm, H]   row-tile of activations (resident across j)
    # w1_ref : [tn, H]   row-block j of linear1.weight (native [4H, H] layout)
    # w2_ref : [H, tn]   column-block j of linear2.weight (native [H, 4H] layout)
    # o_ref  : [tm, H]   output row-tile (resident across j)
    # acc_ref: [tm, H]   f32 accumulator scratch
    j = pl.program_id(1)

    @pl.when(j == 0)
    def _():
        acc_ref[...] = jnp.zeros_like(acc_ref)

    x = x_ref[...]

    # linear1 partial: h_j = x @ W1[j_block, :].T  -> [tm, tn]   (MXU, trans_b)
    h = jax.lax.dot_general(
        x, w1_ref[...],
        dimension_numbers=(((1,), (1,)), ((), ())),
        preferred_element_type=jnp.float32)

    if approximate_gelu:
        # tanh-approximate GELU (EUP path; cheaper, small numerical difference)
        c = jnp.float32(math.sqrt(2.0 / math.pi))
        h = 0.5 * h * (1.0 + jnp.tanh(c * (h + jnp.float32(0.044715) * h * h * h)))
    else:
        # exact erf GELU, matching torch.nn.functional.gelu default
        h = 0.5 * h * (1.0 + jax.lax.erf(h * jnp.float32(1.0 / math.sqrt(2.0))))

    # linear2 partial: acc += h_j @ W2[:, j_block].T  -> [tm, H]  (MXU, trans_b)
    acc_ref[...] += jax.lax.dot_general(
        h.astype(x.dtype), w2_ref[...],
        dimension_numbers=(((1,), (1,)), ((), ())),
        preferred_element_type=jnp.float32)

    @pl.when(j == pl.num_programs(1) - 1)
    def _():
        o_ref[...] = acc_ref[...].astype(o_ref.dtype)


def pipeline_stage_forward(x, w1, w2, *, tm=None, tn=None, approximate_gelu=False):
    """Pallas forward of PipelineStage.

    x  : [..., H]   activations (any leading dims, like PyTorch)
    w1 : [4H, H]    linear1.weight (native PyTorch layout)
    w2 : [H, 4H]    linear2.weight (native PyTorch layout)
    """
    orig_shape = x.shape
    H = orig_shape[-1]
    H4 = 4 * H
    assert w1.shape == (H4, H), "linear1.weight must be [4H, H]"
    assert w2.shape == (H, H4), "linear2.weight must be [H, 4H]"

    x2d = x.reshape(-1, H)
    M = x2d.shape[0]
    bpe = jnp.dtype(x.dtype).itemsize
    packing = 32 // bpe            # sublane packing: 8 (f32), 16 (bf16), 32 (int8)

    # Row tile: large enough to fill MXU rows, multiple of the sublane packing,
    # clamped to the (padded) row count so small demos still compile.
    if tm is None:
        tm = 256
    tm = max(packing, min(_round_up(tm, packing), _round_up(M, packing)))

    # Hidden tile over 4H: lane-dense multiple of 128 that divides 4H.
    if tn is None:
        tn = H4
        for cand in (512, 256, 128):
            if H4 % cand == 0:
                tn = cand
                break
    assert H4 % tn == 0, "tn must divide 4*H"

    # Pad rows so arbitrary batch/seq shapes work (padded rows compute zeros).
    Mp = _round_up(M, tm)
    if Mp != M:
        x2d = jnp.pad(x2d, ((0, Mp - M), (0, 0)))

    grid = (Mp // tm, H4 // tn)

    # Explicit VMEM budget: double-buffered in/out tiles + f32 accumulator,
    # with headroom, clamped under v7x's 64 MiB physical VMEM.
    vmem_need = 2 * (2 * tm * H * bpe + 2 * tn * H * bpe) + tm * H * 4
    vmem_limit = int(min(max(vmem_need + (8 << 20), 32 << 20), 60 << 20))

    kernel = functools.partial(_mlp_kernel, approximate_gelu=approximate_gelu)

    out2d = pl.pallas_call(
        kernel,
        out_shape=jax.ShapeDtypeStruct((Mp, H), x.dtype),
        grid_spec=pltpu.PrefetchScalarGridSpec(
            num_scalar_prefetch=0,
            grid=grid,
            in_specs=[
                pl.BlockSpec((tm, H), lambda i, j: (i, 0)),   # x row-tile
                pl.BlockSpec((tn, H), lambda i, j: (j, 0)),   # W1 row-block
                pl.BlockSpec((H, tn), lambda i, j: (0, j)),   # W2 col-block
            ],
            out_specs=pl.BlockSpec((tm, H), lambda i, j: (i, 0)),
            scratch_shapes=[pltpu.VMEM((tm, H), jnp.float32)],
        ),
        compiler_params=pltpu.CompilerParams(
            dimension_semantics=("parallel", "arbitrary"),
            vmem_limit_bytes=vmem_limit,
        ),
        cost_estimate=pl.CostEstimate(
            flops=4 * Mp * H * H4,                      # two matmuls
            transcendentals=Mp * H4,                    # GELU erf/tanh
            bytes_accessed=(2 * Mp * H + 2 * H * H4) * bpe,
        ),
    )(x2d, w1, w2)

    if Mp != M:
        out2d = out2d[:M]
    return out2d.reshape(orig_shape)


def _reference(x, w1, w2):
    h = x @ w1.T
    h = 0.5 * h * (1.0 + jax.lax.erf(h / jnp.sqrt(2.0).astype(h.dtype)))
    return h @ w2.T


if __name__ == "__main__":
    # small shapes consistent with the module: batch=2, seq=8, hidden=32
    B, S, H = 2, 8, 32
    key = jax.random.PRNGKey(0)
    kx, k1, k2 = jax.random.split(key, 3)

    x = jax.random.normal(kx, (B, S, H), dtype=jnp.float32)

    # deterministic parameter init (nn.Linear-style uniform bounds)
    bound1 = 1.0 / math.sqrt(H)
    bound2 = 1.0 / math.sqrt(4 * H)
    w1 = jax.random.uniform(k1, (4 * H, H), jnp.float32, -bound1, bound1)  # linear1.weight
    w2 = jax.random.uniform(k2, (H, 4 * H), jnp.float32, -bound2, bound2)  # linear2.weight

    out = pipeline_stage_forward(x, w1, w2)
    out = jax.block_until_ready(out)

    ref = _reference(x.reshape(-1, H), w1, w2).reshape(B, S, H)
    assert out.shape == (B, S, H)
    assert jnp.allclose(out, ref, atol=1e-5, rtol=1e-5), "mismatch vs reference"

    # TODO(synk): backward pass / WeightGradStore-deferred weight grads and the
    # overlapped_forward_backward scheduling are pipeline-parallel training
    # machinery, not part of this forward kernel.

    print("KERNEL_OK")
</pallas_src>

<mosaic_0001>
module attributes {stable_mosaic.version = 11 : i64} {
  func.func @_mlp_kernel(%arg0: i32, %arg1: i32, %arg2: memref<16x32xf32, #tpu.memory_space<vmem>>, %arg3: memref<128x32xf32, #tpu.memory_space<vmem>>, %arg4: memref<32x128xf32, #tpu.memory_space<vmem>>, %arg5: memref<16x32xf32, #tpu.memory_space<vmem>>, %arg6: memref<16x32xf32, #tpu.memory_space<vmem>>) attributes {dimension_semantics = [#tpu.dimension_semantics<parallel>, #tpu.dimension_semantics<arbitrary>], iteration_bounds = array<i64: 1, 1>, scalar_prefetch = 0 : i64, scratch_operands = 1 : i64, tpu.core_type = #tpu.core_type<tc>, window_params = [{transform_indices = @transform_0, window_bounds = array<i64: 16, 32>}, {transform_indices = @transform_1, window_bounds = array<i64: 128, 32>}, {transform_indices = @transform_2, window_bounds = array<i64: 32, 128>}, {transform_indices = @transform_3, window_bounds = array<i64: 16, 32>}]} {
    %c0_i32 = arith.constant 0 : i32
    %0 = arith.cmpi eq, %arg1, %c0_i32 : i32
    %1 = arith.extui %0 : i1 to i32
    %c0_i32_0 = arith.constant 0 : i32
    %2 = arith.cmpi ne, %1, %c0_i32_0 : i32
    scf.if %2 {
      %cst_16 = arith.constant 0.000000e+00 : f32
      %22 = vector.broadcast %cst_16 : f32 to vector<16x32xf32>
      %c0_17 = arith.constant 0 : index
      %c0_18 = arith.constant 0 : index
      %23 = vector.load %arg6[%c0_17, %c0_18] : memref<16x32xf32, #tpu.memory_space<vmem>>, vector<16x32xf32>
      tpu.vector_store %arg6[%c0_17, %c0_18], %22 {strides = array<i32>} : memref<16x32xf32, #tpu.memory_space<vmem>>, vector<16x32xf32>,
    } else {
    }
    %c0 = arith.constant 0 : index
    %c0_1 = arith.constant 0 : index
    %3 = vector.load %arg2[%c0, %c0_1] : memref<16x32xf32, #tpu.memory_space<vmem>>, vector<16x32xf32>
    %c0_2 = arith.constant 0 : index
    %c0_3 = arith.constant 0 : index
    %4 = vector.load %arg3[%c0_2, %c0_3] : memref<128x32xf32, #tpu.memory_space<vmem>>, vector<128x32xf32>
    %cst = arith.constant dense<0.000000e+00> : vector<16x128xf32>
    %5 = tpu.matmul %3, %4, %cst {dimension_numbers = #tpu.dot_dimension_numbers<[1], [1], [0], [0], [0, 0, 1, 0], [], []>} : vector<16x32xf32>, vector<128x32xf32>, vector<16x128xf32> -> vector<16x128xf32>
    %cst_4 = arith.constant 5.000000e-01 : f32
    %6 = vector.broadcast %cst_4 : f32 to vector<16x128xf32>
    %7 = arith.mulf %6, %5 : vector<16x128xf32>
    %cst_5 = arith.constant 0.707106769 : f32
    %8 = vector.broadcast %cst_5 : f32 to vector<16x128xf32>
    %9 = arith.mulf %5, %8 : vector<16x128xf32>
    %10 = math.erf %9 : vector<16x128xf32>
    %cst_6 = arith.constant 1.000000e+00 : f32
    %11 = vector.broadcast %cst_6 : f32 to vector<16x128xf32>
    %12 = arith.addf %11, %10 : vector<16x128xf32>
    %13 = arith.mulf %7, %12 : vector<16x128xf32>
    %c0_7 = arith.constant 0 : index
    %c0_8 = arith.constant 0 : index
    %14 = vector.load %arg6[%c0_7, %c0_8] : memref<16x32xf32, #tpu.memory_space<vmem>>, vector<16x32xf32>
    %c0_9 = arith.constant 0 : index
    %c0_10 = arith.constant 0 : index
    %15 = vector.load %arg4[%c0_9, %c0_10] : memref<32x128xf32, #tpu.memory_space<vmem>>, vector<32x128xf32>
    %cst_11 = arith.constant dense<0.000000e+00> : vector<16x32xf32>
    %16 = tpu.matmul %13, %15, %cst_11 {dimension_numbers = #tpu.dot_dimension_numbers<[1], [1], [0], [0], [0, 0, 1, 0], [], []>} : vector<16x128xf32>, vector<32x128xf32>, vector<16x32xf32> -> vector<16x32xf32>
    %17 = arith.addf %14, %16 : vector<16x32xf32>
    %c0_12 = arith.constant 0 : index
    %c0_13 = arith.constant 0 : index
    %18 = vector.load %arg6[%c0_12, %c0_13] : memref<16x32xf32, #tpu.memory_space<vmem>>, vector<16x32xf32>
    tpu.vector_store %arg6[%c0_12, %c0_13], %17 {strides = array<i32>} : memref<16x32xf32, #tpu.memory_space<vmem>>, vector<16x32xf32>,
    %c0_i32_14 = arith.constant 0 : i32
    %19 = arith.cmpi eq, %arg1, %c0_i32_14 : i32
    %20 = arith.extui %19 : i1 to i32
    %c0_i32_15 = arith.constant 0 : i32
    %21 = arith.cmpi ne, %20, %c0_i32_15 : i32
    scf.if %21 {
      %c0_16 = arith.constant 0 : index
      %c0_17 = arith.constant 0 : index
      %22 = vector.load %arg6[%c0_16, %c0_17] : memref<16x32xf32, #tpu.memory_space<vmem>>, vector<16x32xf32>
      %c0_18 = arith.constant 0 : index
      %c0_19 = arith.constant 0 : index
      %23 = vector.load %arg5[%c0_18, %c0_19] : memref<16x32xf32, #tpu.memory_space<vmem>>, vector<16x32xf32>
      tpu.vector_store %arg5[%c0_18, %c0_19], %22 {strides = array<i32>} : memref<16x32xf32, #tpu.memory_space<vmem>>, vector<16x32xf32>,
    } else {
    }
    return
  }
  func.func @transform_0(%arg0: i32, %arg1: i32) -> (i32, i32) {
    %c0_i32 = arith.constant 0 : i32
    %c0_i32_0 = arith.constant 0 : i32
    return %arg0, %c0_i32 : i32, i32
  }
  func.func @transform_1(%arg0: i32, %arg1: i32) -> (i32, i32) {
    %c0_i32 = arith.constant 0 : i32
    %c0_i32_0 = arith.constant 0 : i32
    return %arg1, %c0_i32 : i32, i32
  }
  func.func @transform_2(%arg0: i32, %arg1: i32) -> (i32, i32) {
    %c0_i32 = arith.constant 0 : i32
    %c0_i32_0 = arith.constant 0 : i32
    return %c0_i32, %arg1 : i32, i32
  }
  func.func @transform_3(%arg0: i32, %arg1: i32) -> (i32, i32) {
    %c0_i32 = arith.constant 0 : i32
    %c0_i32_0 = arith.constant 0 : i32
    return %arg0, %c0_i32 : i32, i32
  }
}

</mosaic_0001>

<llo_original>
// kernel: tpu_custom_call.1
$region0: #{tpu_custom_call.1}
  #allocation0 [shape = 'u32[]', space=smem, size = 0x4, offset = 0x4, fixed_abs, tag = 'smem constant byte address 0x4 - core index']
  #allocation1 [shape = 'u32[72,128]{1,0:T(1,128)}', space=vmem, size = 0x9000, scoped, tag = 'internal scratch']
  #allocation2 [shape = 'f32[16,32]{1,0:T(8,128)}', space=vmem, size = 0x2000, scoped, tag = 'scratch operand']
  %s0 = inlined_call_operand.vmem [shape: f32[16,32], index: 0, kind: input, shape index: {}]
  %s1 = inlined_call_operand.vmem [shape: f32[128,32], index: 1, kind: input, shape index: {}]
  %s2 = inlined_call_operand.vmem [shape: f32[32,128], index: 2, kind: input, shape index: {}]
  %s3 = inlined_call_operand.hbm [shape: f32[16,32], index: 3, kind: output, shape index: {}]
  %s4 = sld [smem:[#allocation0]]
  $region30: #{tpu_custom_call.1} parent=0
    _
  %s6 = ssub.s32 1, %s4
  %s7 = scalar_select 0, %s6, %s4
  $region1: #{tpu_custom_call.1} parent=0
    #allocation3 [shape = 'u8[8192]{0}', space=vmem, size = 0x2000, scoped, tag = 'output window, operand 0, single buffered']
    #allocation4 [shape = 's32[1]{0}', space=sflag, size = 0x4, scoped, tag = 'scoped memory for tpu_custom_call.1']
    %8 = vsyncpa [#allocation4], 0
    // Predicated region
    $region2: #{tpu_custom_call.1} parent=1 // pred_check
      _
    $region3: #{tpu_custom_call.1} parent=1 // pred_check_branch
      %10 = sbr.rel (0) target = $region5
    $region4: #{tpu_custom_call.1} parent=1 // pred_region
      _
    $region5: #{tpu_custom_call.1} parent=1 // pred_fallthru
      _
    // Predicated region
    $region6: #{tpu_custom_call.1} parent=1 // pred_check
      _
    $region7: #{tpu_custom_call.1} parent=1 // pred_check_branch
      %12 = sbr.rel (0) target = $region9
    $region8: #{tpu_custom_call.1} parent=1 // pred_region
      _
    $region9: #{tpu_custom_call.1} parent=1 // pred_fallthru
      _
    // Predicated region
    $region10: #{tpu_custom_call.1} parent=1 // pred_check
      _
    $region11: #{tpu_custom_call.1} parent=1 // pred_check_branch
      %14 = sbr.rel (0) target = $region13
    $region12: #{tpu_custom_call.1} parent=1 // pred_region
      _
    $region13: #{tpu_custom_call.1} parent=1 // pred_fallthru
      _
    %p15 = scmp.eq.s32.totalorder 0, 0
    // Predicated region
    $region14: #{tpu_custom_call.1} parent=1 // pred_check
      %p16 = pneg %p15
    $region15: #{tpu_custom_call.1} parent=1 // pred_check_branch
      %18 = sbr.rel (%p16) target = $region17
    $region16: #{tpu_custom_call.1} parent=1 // pred_region
      %vm19 = vcmask 261120
      %20 = vst.msk [vmem:[#allocation2] sm:$0xff] %vm19, 0.0
      %21 = vst.msk [vmem:[#allocation2 + $0x8] sm:$0xff] %vm19, 0.0
    $region17: #{tpu_custom_call.1} parent=1 // pred_fallthru
      _
    %v22 = vld [vmem:[%s0] sm:$0xff]
    %v23 = vld [vmem:[%s0 + $0x8] sm:$0xff]
    %v24 = vld [vmem:[%s1] sm:$0xff]
    %v25 = vld [vmem:[%s1 + $0x8] sm:$0xff]
    %v26 = vld [vmem:[%s1 + $0x10] sm:$0xff]
    %v27 = vld [vmem:[%s1 + $0x18] sm:$0xff]
    %v28 = vld [vmem:[%s1 + $0x20] sm:$0xff]
    %v29 = vld [vmem:[%s1 + $0x28] sm:$0xff]
    %v30 = vld [vmem:[%s1 + $0x30] sm:$0xff]
    %v31 = vld [vmem:[%s1 + $0x38] sm:$0xff]
    %v32 = vld [vmem:[%s1 + $0x40] sm:$0xff]
    %v33 = vld [vmem:[%s1 + $0x48] sm:$0xff]
    %v34 = vld [vmem:[%s1 + $0x50] sm:$0xff]
    %v35 = vld [vmem:[%s1 + $0x58] sm:$0xff]
    %v36 = vld [vmem:[%s1 + $0x60] sm:$0xff]
    %v37 = vld [vmem:[%s1 + $0x68] sm:$0xff]
    %v38 = vld [vmem:[%s1 + $0x70] sm:$0xff]
    %v39 = vld [vmem:[%s1 + $0x78] sm:$0xff]
    %vm40 = vcmask 261120
    %v42 = vsel %vm40, %v22, 0
    %v45 = vsel %vm40, %v23, 0
    %v48 = vsel %vm40, %v24, 0
    %v51 = vsel %vm40, %v25, 0
    %v54 = vsel %vm40, %v26, 0
    %v57 = vsel %vm40, %v27, 0
    %v60 = vsel %vm40, %v28, 0
    %v63 = vsel %vm40, %v29, 0
    %v66 = vsel %vm40, %v30, 0
    %v69 = vsel %vm40, %v31, 0
    %v72 = vsel %vm40, %v32, 0
    %v75 = vsel %vm40, %v33, 0
    %v78 = vsel %vm40, %v34, 0
    %v81 = vsel %vm40, %v35, 0
    %v84 = vsel %vm40, %v36, 0
    %v87 = vsel %vm40, %v37, 0
    %v90 = vsel %vm40, %v38, 0
    %v93 = vsel %vm40, %v39, 0
    %95 = vmatpush.xpose.msra.mxu0 %v93
    %96 = vmatpush.xpose.msra.mxu0 %v90
    %97 = vmatpush.xpose.msra.mxu0 %v87
    %98 = vmatpush.xpose.msra.mxu0 %v84
    %99 = vmatpush.xpose.msra.mxu0 %v81
    %100 = vmatpush.xpose.msra.mxu0 %v78
    %101 = vmatpush.xpose.msra.mxu0 %v75
    %102 = vmatpush.xpose.msra.mxu0 %v72
    %103 = vmatpush.xpose.msra.mxu0 %v69
    %104 = vmatpush.xpose.msra.mxu0 %v66
    %105 = vmatpush.xpose.msra.mxu0 %v63
    %106 = vmatpush.xpose.msra.mxu0 %v60
    %107 = vmatpush.xpose.msra.mxu0 %v57
    %108 = vmatpush.xpose.msra.mxu0 %v54
    %109 = vmatpush.xpose.msra.mxu0 %v51
    %110 = vmatpush.xpose.msra.mxu0 %v48
    %111 = vmatmul.f32.gmra.mxu0 %v42
    %v112 = vpop.f32.mrf.mxu0
    %v113 = vadd.f32 0.0, %v112
    %114 = vmatmul.f32.gmra.mxu0 %v45
    %v115 = vpop.f32.mrf.mxu0
    %v116 = vadd.f32 0.0, %v115
    %117 = vdwg.mxu0
    %v118 = vmul.f32 %v113, 0.5
    %v119 = vmul.f32 %v116, 0.5
    %v120 = vmul.f32 %v113, 0.70710677
    %v121 = vmul.f32 %v116, 0.70710677
    %v122 = vmul.f32 %v120, %v120
    %v123 = vmin.f32 16.0, %v122
    %v124 = vmul.f32 %v123, 2.1237322e-06
    %v125 = vadd.f32 %v124, 0.00028619796
    %v126 = vmul.f32 %v123, %v125
    %v127 = vadd.f32 %v126, 0.0036580483
    %v128 = vmul.f32 %v123, %v127
    %v129 = vadd.f32 %v128, 0.05243302
    %v130 = vmul.f32 %v123, %v129
    %v131 = vadd.f32 %v130, 0.18741608
    %v132 = vmul.f32 %v123, %v131
    %v133 = vadd.f32 %v132, 1.1283791
    %v134 = vmul.f32 %v120, %v133
    %v135 = vmul.f32 %v123, 3.8918573e-05
    %v136 = vadd.f32 %v135, 0.001143296
    %v137 = vmul.f32 %v123, %v136
    %v138 = vadd.f32 %v137, 0.014752088
    %v139 = vmul.f32 %v123, %v138
    %v140 = vadd.f32 %v139, 0.112945676
    %v141 = vmul.f32 %v123, %v140
    %v142 = vadd.f32 %v141, 0.4994258
    %v143 = vmul.f32 %v123, %v142
    %v144 = vadd.f32 %v143, 1.0
    %v145 = vrcp.pop %v144
    %v146 = vmul.f32 %v144, %v145
    %v147 = vsub.f32 1.0, %v146
    %v148 = vmul.f32 %v145, %v147
    %v149 = vadd.f32 %v145, %v148
    %vm150 = vweird.f32 %v144
    %vm151 = vweird.f32 %v145
    %vm152 = vmor %vm150, %vm151
    %v153 = vsel %vm152, %v145, %v149
    %v154 = vand.u32 2147483647, %v144
    %vm155 = vcmp.eq.f32.partialorder %v154, 8.507059e+37
    %v156 = vand.u32 %v144, 2147483648
    %v157 = vor.u32 1.1754944e-38, %v156
    %v158 = vsel %vm155, %v157, %v153
    %v159 = vmul.f32 %v134, %v158
    %v160 = vmin.f32 %v159, 1.0
    %v161 = vmax.f32 %v160, -1.0
    %v162 = vmul.f32 %v121, %v121
    %v163 = vmin.f32 16.0, %v162
    %v164 = vmul.f32 %v163, 2.1237322e-06
    %v165 = vadd.f32 %v164, 0.00028619796
    %v166 = vmul.f32 %v163, %v165
    %v167 = vadd.f32 %v166, 0.0036580483
    %v168 = vmul.f32 %v163, %v167
    %v169 = vadd.f32 %v168, 0.05243302
    %v170 = vmul.f32 %v163, %v169
    %v171 = vadd.f32 %v170, 0.18741608
    %v172 = vmul.f32 %v163, %v171
    %v173 = vadd.f32 %v172, 1.1283791
    %v174 = vmul.f32 %v121, %v173
    %v175 = vmul.f32 %v163, 3.8918573e-05
    %v176 = vadd.f32 %v175, 0.001143296
    %v177 = vmul.f32 %v163, %v176
    %v178 = vadd.f32 %v177, 0.014752088
    %v179 = vmul.f32 %v163, %v178
    %v180 = vadd.f32 %v179, 0.112945676
    %v181 = vmul.f32 %v163, %v180
    %v182 = vadd.f32 %v181, 0.4994258
    %v183 = vmul.f32 %v163, %v182
    %v184 = vadd.f32 %v183, 1.0
    %v185 = vrcp.pop %v184
    %v186 = vmul.f32 %v184, %v185
    %v187 = vsub.f32 1.0, %v186
    %v188 = vmul.f32 %v185, %v187
    %v189 = vadd.f32 %v185, %v188
    %vm190 = vweird.f32 %v184
    %vm191 = vweird.f32 %v185
    %vm192 = vmor %vm190, %vm191
    %v193 = vsel %vm192, %v185, %v189
    %v194 = vand.u32 2147483647, %v184
    %vm195 = vcmp.eq.f32.partialorder %v194, 8.507059e+37
    %v196 = vand.u32 %v184, 2147483648
    %v197 = vor.u32 1.1754944e-38, %v196
    %v198 = vsel %vm195, %v197, %v193
    %v199 = vmul.f32 %v174, %v198
    %v200 = vmin.f32 %v199, 1.0
    %v201 = vmax.f32 %v200, -1.0
    %v202 = vadd.f32 %v161, 1.0
    %v203 = vadd.f32 %v201, 1.0
    %v204 = vmul.f32 %v118, %v202
    %v205 = vmul.f32 %v119, %v203
    %v206 = vld [vmem:[#allocation2] sm:$0xff]
    %v207 = vld [vmem:[#allocation2 + $0x8] sm:$0xff]
    %v208 = vld [vmem:[%s2] sm:$0xff]
    %v209 = vld [vmem:[%s2 + $0x8] sm:$0xff]
    %v210 = vld [vmem:[%s2 + $0x10] sm:$0xff]
    %v211 = vld [vmem:[%s2 + $0x18] sm:$0xff]
    %212 = vmatpush.xpose.msra.mxu0 0.0
    %213 = vmatpush.xpose.msra.mxu0 0.0
    %214 = vmatpush.xpose.msra.mxu0 0.0
    %215 = vmatpush.xpose.msra.mxu0 0.0
    %216 = vmatpush.xpose.msra.mxu0 0.0
    %217 = vmatpush.xpose.msra.mxu0 0.0
    %218 = vmatpush.xpose.msra.mxu0 0.0
    %219 = vmatpush.xpose.msra.mxu0 0.0
    %220 = vmatpush.xpose.msra.mxu0 0.0
    %221 = vmatpush.xpose.msra.mxu0 0.0
    %222 = vmatpush.xpose.msra.mxu0 0.0
    %223 = vmatpush.xpose.msra.mxu0 0.0
    %224 = vmatpush.xpose.msra.mxu0 %v211
    %225 = vmatpush.xpose.msra.mxu0 %v210
    %226 = vmatpush.xpose.msra.mxu0 %v209
    %227 = vmatpush.xpose.msra.mxu0 %v208
    %228 = vmatmul.f32.gmra.mxu0 %v204
    %v229 = vpop.f32.mrf.mxu0
    %v230 = vadd.f32 0.0, %v229
    %231 = vmatmul.f32.gmra.mxu0 %v205
    %v232 = vpop.f32.mrf.mxu0
    %v233 = vadd.f32 0.0, %v232
    %234 = vdwg.mxu0
    %v235 = vadd.f32 %v206, %v230
    %v236 = vadd.f32 %v207, %v233
    %237 = vst.msk [vmem:[#allocation2] sm:$0xff] %vm40, %v235
    %238 = vst.msk [vmem:[#allocation2 + $0x8] sm:$0xff] %vm40, %v236
    // Predicated region
    $region18: #{tpu_custom_call.1} parent=1 // pred_check
      %p239 = pneg %p15
    $region19: #{tpu_custom_call.1} parent=1 // pred_check_branch
      %241 = sbr.rel (%p239) target = $region21
    $region20: #{tpu_custom_call.1} parent=1 // pred_region
      %v242 = vld [vmem:[#allocation2] sm:$0xff]
      %v243 = vld [vmem:[#allocation2 + $0x8] sm:$0xff]
      %244 = vst.msk [vmem:[#allocation3] sm:$0xff] %vm40, %v242
      %245 = vst.msk [vmem:[#allocation3 + $0x8] sm:$0xff] %vm40, %v243
    $region21: #{tpu_custom_call.1} parent=1 // pred_fallthru
      _
    // Predicated region
    $region22: #{tpu_custom_call.1} parent=1 // pred_check
      _
    $region23: #{tpu_custom_call.1} parent=1 // pred_check_branch
      %247 = sbr.rel (0) target = $region25
    $region24: #{tpu_custom_call.1} parent=1 // pred_region
      %249 = vsyncadd [#allocation4], 0
      %s250 = sshll.u32 [#allocation3], 4
      %s251 = int_to_ptr.vmem [resolvable:$true] %s250
      %s252 = sshll.u32 %s3, 4
      %s253 = int_to_ptr.hbm [resolvable:$true] %s252
      %258 = dma.vmem_to_hbm [thread:$0]  %s251, 256, %s253, [#allocation4], 128, 128, 8
    $region25: #{tpu_custom_call.1} parent=1 // pred_fallthru
      _
    // Predicated region
    $region26: #{tpu_custom_call.1} parent=1 // pred_check
      _
    $region27: #{tpu_custom_call.1} parent=1 // pred_check_branch
      %260 = sbr.rel (0) target = $region29
    $region28: #{tpu_custom_call.1} parent=1 // pred_region
      %262 = dma.done [#allocation4], 256
    $region29: #{tpu_custom_call.1} parent=1 // pred_fallthru
      _
    %263 = vsyncpa [#allocation4], 1

</llo_original>
